<compile_context>
chip_gen: v7x
topology: tpu7x:2x2x1
jax: 0.10.0
libtpu: 0.0.40
codegen_flags: <defaults>
</compile_context>

<pallas_src>
import functools

import jax
import jax.numpy as jnp
from jax.experimental import pallas as pl
from jax.experimental.pallas import tpu as pltpu

BN_EPS = 1e-5
CO = 16      # conv output channels
KP = 12      # im2col patch length: 3 channels * 2 * 2


def _round_up(x, m):
    return (x + m - 1) // m * m


def _make_kernel(B, S, TS):
    """Kernel body; B (batch), S (true spatial size), TS (tile) are static."""
    n_valid = float(B * S)          # BN normalizes over (B, Ho, Wo) per channel

    def kernel(patches_ref, wconv_ref, wpack_ref, bpack_ref, out_ref,
               sum_ref, sumsq_ref, max_ref, min_ref):
        t = pl.program_id(0)

        # ---- init streaming accumulators --------------------------------
        @pl.when(t == 0)
        def _init():
            sum_ref[...] = jnp.zeros(sum_ref.shape, jnp.float32)
            sumsq_ref[...] = jnp.zeros(sumsq_ref.shape, jnp.float32)
            max_ref[...] = jnp.full(max_ref.shape, -jnp.inf, jnp.float32)
            min_ref[...] = jnp.full(min_ref.shape, jnp.inf, jnp.float32)

        # ---- Conv2d(3,16,k=2,s=2) on this spatial tile (bf16 MXU, f32 acc)
        w = jnp.broadcast_to(wconv_ref[...], (B, CO, KP))            # (B,16,12)
        conv = jnp.einsum("bok,bkt->bot", w, patches_ref[...],
                          preferred_element_type=jnp.float32)        # (B,16,TS)
        # conv bias intentionally omitted: training-mode BN cancels it exactly.

        # mask spatial positions that are padding (S rounded up to TS)
        col = jax.lax.broadcasted_iota(jnp.int32, (1, 1, TS), 2) + t * TS
        valid = col < S

        c0 = jnp.where(valid, conv, 0.0)
        sum_ref[...] += jnp.sum(c0, axis=-1)                         # (B,16)
        sumsq_ref[...] += jnp.sum(c0 * c0, axis=-1)
        max_ref[...] = jnp.maximum(
            max_ref[...], jnp.max(jnp.where(valid, conv, -jnp.inf), axis=-1))
        min_ref[...] = jnp.minimum(
            min_ref[...], jnp.min(jnp.where(valid, conv, jnp.inf), axis=-1))

        # ---- finalize once: BN affine + ReLU + max-pool + MLP + softmax --
        @pl.when(t == pl.num_programs(0) - 1)
        def _finalize():
            mean = jnp.sum(sum_ref[...], axis=0, keepdims=True) / n_valid
            ex2 = jnp.sum(sumsq_ref[...], axis=0, keepdims=True) / n_valid
            var = jnp.maximum(ex2 - mean * mean, 0.0)   # biased (training) var

            bp = bpack_ref[...]                         # (8,16) f32
            gamma, beta = bp[0:1, :], bp[1:2, :]
            b1, b2, b3 = bp[2:3, :], bp[3:4, :], bp[4:5, :]

            scale = gamma * jax.lax.rsqrt(var + BN_EPS)  # (1,16)
            shift = beta - scale * mean
            # relu(scale*conv+shift) is monotone in conv with slope sign(scale):
            # pool from the pre-BN max when scale>=0, from the min otherwise.
            sel = jnp.where(scale >= 0.0, max_ref[...], min_ref[...])  # (B,16)
            pooled = jnp.maximum(sel * scale + shift, 0.0)             # (B,16)

            wp = wpack_ref[...]                          # (48,16) f32
            z = jnp.maximum(
                jnp.dot(pooled, wp[0:16, :],
                        preferred_element_type=jnp.float32) + b1, 0.0)
            z = jnp.maximum(
                jnp.dot(z, wp[16:32, :],
                        preferred_element_type=jnp.float32) + b2, 0.0)
            z = jnp.dot(z, wp[32:48, :],
                        preferred_element_type=jnp.float32) + b3
            logits = z[:, 0:4]                           # padded cols are zero
            m = jnp.max(logits, axis=-1, keepdims=True)
            e = jnp.exp(logits - m)
            out_ref[...] = e / jnp.sum(e, axis=-1, keepdims=True)

    return kernel


def _pack_params(p):
    wconv = p["conv_w"].reshape(CO, KP).astype(jnp.bfloat16)        # (16,12)

    w1 = p["fc1_w"].T.astype(jnp.float32)                           # (16,16)
    w2 = jnp.zeros((16, 16), jnp.float32).at[:, :8].set(p["fc2_w"].T)
    w3 = jnp.zeros((16, 16), jnp.float32).at[:8, :4].set(p["fc3_w"].T)
    wpack = jnp.concatenate([w1, w2, w3], axis=0)                   # (48,16)

    bpack = jnp.zeros((8, 16), jnp.float32)
    bpack = bpack.at[0, :].set(p["bn_gamma"])
    bpack = bpack.at[1, :].set(p["bn_beta"])
    bpack = bpack.at[2, :].set(p["fc1_b"])
    bpack = bpack.at[3, :8].set(p["fc2_b"])
    bpack = bpack.at[4, :4].set(p["fc3_b"])
    return wconv, wpack, bpack


@functools.partial(jax.jit, static_argnames=("tile_s",))
def brain_forward(x_nchw, p, *, tile_s=2048):
    B, C, H, W = x_nchw.shape
    Ho, Wo = H // 2, W // 2
    x_nchw = x_nchw[:, :, :2 * Ho, :2 * Wo]      # conv k=2,s=2 drops odd edge
    S = Ho * Wo

    # spatial tile: multiple of 128 lanes, capped so the f32 conv tile <= ~4 MiB
    cap = max(128, ((4 * 1024 * 1024 // (CO * 4)) // max(B, 1)) // 128 * 128)
    ts = max(128, min(tile_s, cap, _round_up(S, 128)))
    s_pad = _round_up(S, ts)
    n_tiles = s_pad // ts

    # im2col for the non-overlapping 2x2/stride-2 conv, transposed so the long
    # spatial axis lands on the 128-lane axis, cast to bf16 (halves HBM bytes).
    patches = (x_nchw.reshape(B, C, Ho, 2, Wo, 2)
               .transpose(0, 1, 3, 5, 2, 4)          # (b, ci, kh, kw, ho, wo)
               .reshape(B, KP, S)
               .astype(jnp.bfloat16))
    if s_pad != S:
        patches = jnp.pad(patches, ((0, 0), (0, 0), (0, s_pad - S)))

    wconv, wpack, bpack = _pack_params(p)
    kernel = _make_kernel(B, S, ts)

    out = pl.pallas_call(
        kernel,
        out_shape=jax.ShapeDtypeStruct((B, 4), jnp.float32),
        grid_spec=pltpu.PrefetchScalarGridSpec(
            num_scalar_prefetch=0,
            grid=(n_tiles,),
            in_specs=[
                pl.BlockSpec((B, KP, ts), lambda t: (0, 0, t)),   # activations
                pl.BlockSpec((CO, KP), lambda t: (0, 0)),         # conv weight
                pl.BlockSpec((48, 16), lambda t: (0, 0)),         # FC weights
                pl.BlockSpec((8, 16), lambda t: (0, 0)),          # biases/affine
            ],
            out_specs=pl.BlockSpec((B, 4), lambda t: (0, 0)),
            scratch_shapes=[
                pltpu.VMEM((B, CO), jnp.float32),   # sum
                pltpu.VMEM((B, CO), jnp.float32),   # sum of squares
                pltpu.VMEM((B, CO), jnp.float32),   # running max of conv
                pltpu.VMEM((B, CO), jnp.float32),   # running min of conv
            ],
        ),
        compiler_params=pltpu.CompilerParams(
            dimension_semantics=("arbitrary",),
            vmem_limit_bytes=32 * 1024 * 1024),
    )(patches, wconv, wpack, bpack)
    return out


def init_params(key):
    ks = jax.random.split(key, 8)
    p = {}
    # Conv2d(3, 16, kernel_size=2, stride=2): weight [16, 3, 2, 2], bias [16]
    p["conv_w"] = 0.1 * jax.random.normal(ks[0], (16, 3, 2, 2), jnp.float32)
    p["conv_b"] = 0.1 * jax.random.normal(ks[1], (16,), jnp.float32)
    # BatchNorm2d(16): gamma=1, beta=0 (PyTorch defaults)
    p["bn_gamma"] = jnp.ones((16,), jnp.float32)
    p["bn_beta"] = jnp.zeros((16,), jnp.float32)
    # Linear(16,16), Linear(16,8), Linear(8,4) (PyTorch weight is [out, in])
    p["fc1_w"] = 0.2 * jax.random.normal(ks[2], (16, 16), jnp.float32)
    p["fc1_b"] = 0.1 * jax.random.normal(ks[3], (16,), jnp.float32)
    p["fc2_w"] = 0.2 * jax.random.normal(ks[4], (8, 16), jnp.float32)
    p["fc2_b"] = 0.1 * jax.random.normal(ks[5], (8,), jnp.float32)
    p["fc3_w"] = 0.2 * jax.random.normal(ks[6], (4, 8), jnp.float32)
    p["fc3_b"] = 0.1 * jax.random.normal(ks[7], (4,), jnp.float32)
    return p


def brain_reference(x_nchw, p, *, bf16_stream=False):
    """Pure-JAX reference matching the PyTorch forward (training-mode BN)."""
    B, C, H, W = x_nchw.shape
    Ho, Wo = H // 2, W // 2
    patches = (x_nchw[:, :, :2 * Ho, :2 * Wo]
               .reshape(B, C, Ho, 2, Wo, 2)
               .transpose(0, 2, 4, 1, 3, 5).reshape(B * Ho * Wo, C * 4))
    wc = p["conv_w"].reshape(16, 12)
    if bf16_stream:      # model the kernel's bf16-rounded activation stream
        patches = patches.astype(jnp.bfloat16).astype(jnp.float32)
        wc = wc.astype(jnp.bfloat16).astype(jnp.float32)
    conv = patches @ wc.T + p["conv_b"]
    mean = jnp.mean(conv, axis=0, keepdims=True)
    var = jnp.mean((conv - mean) ** 2, axis=0, keepdims=True)
    h = jnp.maximum((conv - mean) / jnp.sqrt(var + BN_EPS) * p["bn_gamma"]
                    + p["bn_beta"], 0.0)
    pooled = jnp.max(h.reshape(B, Ho * Wo, 16), axis=1)
    z = jnp.maximum(pooled @ p["fc1_w"].T + p["fc1_b"], 0.0)
    z = jnp.maximum(z @ p["fc2_w"].T + p["fc2_b"], 0.0)
    z = z @ p["fc3_w"].T + p["fc3_b"]
    return jax.nn.softmax(z, axis=1)


if __name__ == "__main__":
    key = jax.random.PRNGKey(0)
    k_x, k_p = jax.random.split(key)
    x = jax.random.normal(k_x, (2, 3, 16, 16), jnp.float32)
    params = init_params(k_p)

    out = brain_forward(x, params)
    out = jax.block_until_ready(out)

    ref_bf16 = brain_reference(x, params, bf16_stream=True)
    ref_f32 = brain_reference(x, params, bf16_stream=False)
    assert out.shape == (2, 4), out.shape
    assert bool(jnp.allclose(jnp.sum(out, axis=1), 1.0, atol=1e-4))
    assert bool(jnp.allclose(out, ref_bf16, atol=2e-3, rtol=2e-3)), (out, ref_bf16)
    assert bool(jnp.allclose(out, ref_f32, atol=1e-2, rtol=1e-2)), (out, ref_f32)

    # also exercise the gamma<0 pooling path (min tracking) for correctness
    params_neg = dict(params)
    params_neg["bn_gamma"] = params["bn_gamma"] * jnp.where(
        jnp.arange(16) % 2 == 0, 1.0, -1.0)
    out2 = jax.block_until_ready(brain_forward(x, params_neg))
    ref2 = brain_reference(x, params_neg, bf16_stream=True)
    assert bool(jnp.allclose(out2, ref2, atol=2e-3, rtol=2e-3)), (out2, ref2)

    print("KERNEL_OK")
</pallas_src>

<mosaic_0001>
module attributes {stable_mosaic.version = 11 : i64} {
  func.func @kernel(%arg0: i32, %arg1: memref<2x12x128xbf16, #tpu.memory_space<vmem>>, %arg2: memref<16x12xbf16, #tpu.memory_space<vmem>>, %arg3: memref<48x16xf32, #tpu.memory_space<vmem>>, %arg4: memref<8x16xf32, #tpu.memory_space<vmem>>, %arg5: memref<2x4xf32, #tpu.memory_space<vmem>>, %arg6: memref<2x16xf32, #tpu.memory_space<vmem>>, %arg7: memref<2x16xf32, #tpu.memory_space<vmem>>, %arg8: memref<2x16xf32, #tpu.memory_space<vmem>>, %arg9: memref<2x16xf32, #tpu.memory_space<vmem>>) attributes {dimension_semantics = [#tpu.dimension_semantics<arbitrary>], iteration_bounds = array<i64: 1>, scalar_prefetch = 0 : i64, scratch_operands = 4 : i64, tpu.core_type = #tpu.core_type<tc>, window_params = [{transform_indices = @transform_0, window_bounds = array<i64: 2, 12, 128>}, {pipeline_mode = #tpu.pipeline_mode<synchronous>, transform_indices = @transform_1, window_bounds = array<i64: 16, 12>}, {pipeline_mode = #tpu.pipeline_mode<synchronous>, transform_indices = @transform_2, window_bounds = array<i64: 48, 16>}, {pipeline_mode = #tpu.pipeline_mode<synchronous>, transform_indices = @transform_3, window_bounds = array<i64: 8, 16>}, {pipeline_mode = #tpu.pipeline_mode<synchronous>, transform_indices = @transform_4, window_bounds = array<i64: 2, 4>}]} {
    %c0_i32 = arith.constant 0 : i32
    %0 = arith.cmpi eq, %arg0, %c0_i32 : i32
    %1 = arith.extui %0 : i1 to i32
    %c0_i32_0 = arith.constant 0 : i32
    %2 = arith.cmpi ne, %1, %c0_i32_0 : i32
    scf.if %2 {
      %cst_30 = arith.constant 0.000000e+00 : f32
      %46 = vector.broadcast %cst_30 : f32 to vector<2x16xf32>
      %c0_31 = arith.constant 0 : index
      %c0_32 = arith.constant 0 : index
      %47 = vector.load %arg6[%c0_31, %c0_32] : memref<2x16xf32, #tpu.memory_space<vmem>>, vector<2x16xf32>
      tpu.vector_store %arg6[%c0_31, %c0_32], %46 {strides = array<i32>} : memref<2x16xf32, #tpu.memory_space<vmem>>, vector<2x16xf32>,
      %cst_33 = arith.constant 0.000000e+00 : f32
      %48 = vector.broadcast %cst_33 : f32 to vector<2x16xf32>
      %c0_34 = arith.constant 0 : index
      %c0_35 = arith.constant 0 : index
      %49 = vector.load %arg7[%c0_34, %c0_35] : memref<2x16xf32, #tpu.memory_space<vmem>>, vector<2x16xf32>
      tpu.vector_store %arg7[%c0_34, %c0_35], %48 {strides = array<i32>} : memref<2x16xf32, #tpu.memory_space<vmem>>, vector<2x16xf32>,
      %cst_36 = arith.constant 0xFF800000 : f32
      %50 = vector.broadcast %cst_36 : f32 to vector<2x16xf32>
      %c0_37 = arith.constant 0 : index
      %c0_38 = arith.constant 0 : index
      %51 = vector.load %arg8[%c0_37, %c0_38] : memref<2x16xf32, #tpu.memory_space<vmem>>, vector<2x16xf32>
      tpu.vector_store %arg8[%c0_37, %c0_38], %50 {strides = array<i32>} : memref<2x16xf32, #tpu.memory_space<vmem>>, vector<2x16xf32>,
      %cst_39 = arith.constant 0x7F800000 : f32
      %52 = vector.broadcast %cst_39 : f32 to vector<2x16xf32>
      %c0_40 = arith.constant 0 : index
      %c0_41 = arith.constant 0 : index
      %53 = vector.load %arg9[%c0_40, %c0_41] : memref<2x16xf32, #tpu.memory_space<vmem>>, vector<2x16xf32>
      tpu.vector_store %arg9[%c0_40, %c0_41], %52 {strides = array<i32>} : memref<2x16xf32, #tpu.memory_space<vmem>>, vector<2x16xf32>,
    } else {
    }
    %c0 = arith.constant 0 : index
    %c0_1 = arith.constant 0 : index
    %3 = vector.load %arg2[%c0, %c0_1] : memref<16x12xbf16, #tpu.memory_space<vmem>>, vector<16x12xbf16>
    %4 = vector.shape_cast %3 : vector<16x12xbf16> to vector<1x16x12xbf16>
    %5 = vector.broadcast %4 : vector<1x16x12xbf16> to vector<2x16x12xbf16>
    %c0_2 = arith.constant 0 : index
    %c0_3 = arith.constant 0 : index
    %c0_4 = arith.constant 0 : index
    %6 = vector.load %arg1[%c0_2, %c0_3, %c0_4] : memref<2x12x128xbf16, #tpu.memory_space<vmem>>, vector<2x12x128xbf16>
    "tpu.trace_start"() <{level = 10 : i32, message = "bok,bkt->bot"}> : () -> ()
    %cst = arith.constant dense<0.000000e+00> : vector<2x16x128xf32>
    %7 = tpu.matmul %5, %6, %cst {dimension_numbers = #tpu.dot_dimension_numbers<[2], [1], [1], [2], [0, 0, 0, 1, 1, 2], [0], [0]>} : vector<2x16x12xbf16>, vector<2x12x128xbf16>, vector<2x16x128xf32> -> vector<2x16x128xf32>
    "tpu.trace_stop"() : () -> ()
    %8 = tpu.iota {dimensions = array<i32: 2>} : vector<1x1x128xi32>
    %c128_i32 = arith.constant 128 : i32
    %9 = arith.muli %arg0, %c128_i32 : i32
    %10 = vector.broadcast %9 : i32 to vector<1x1x128xi32>
    %11 = arith.addi %8, %10 : vector<1x1x128xi32>
    %c64_i32 = arith.constant 64 : i32
    %12 = vector.broadcast %c64_i32 : i32 to vector<1x1x128xi32>
    %13 = arith.cmpi slt, %11, %12 : vector<1x1x128xi32>
    %cst_5 = arith.constant 0.000000e+00 : f32
    %14 = vector.shape_cast %13 : vector<1x1x128xi1> to vector<1x1x128xi1>
    %15 = vector.broadcast %14 : vector<1x1x128xi1> to vector<2x16x128xi1>
    %16 = vector.broadcast %cst_5 : f32 to vector<2x16x128xf32>
    %17 = arith.select %15, %7, %16 : vector<2x16x128xi1>, vector<2x16x128xf32>
    %c0_6 = arith.constant 0 : index
    %c0_7 = arith.constant 0 : index
    %18 = vector.load %arg6[%c0_6, %c0_7] : memref<2x16xf32, #tpu.memory_space<vmem>>, vector<2x16xf32>
    %cst_8 = arith.constant dense<0.000000e+00> : vector<2x16xf32>
    %19 = vector.multi_reduction <add>, %17, %cst_8 [2] : vector<2x16x128xf32> to vector<2x16xf32>
    %20 = arith.addf %18, %19 : vector<2x16xf32>
    %c0_9 = arith.constant 0 : index
    %c0_10 = arith.constant 0 : index
    %21 = vector.load %arg6[%c0_9, %c0_10] : memref<2x16xf32, #tpu.memory_space<vmem>>, vector<2x16xf32>
    tpu.vector_store %arg6[%c0_9, %c0_10], %20 {strides = array<i32>} : memref<2x16xf32, #tpu.memory_space<vmem>>, vector<2x16xf32>,
    %c0_11 = arith.constant 0 : index
    %c0_12 = arith.constant 0 : index
    %22 = vector.load %arg7[%c0_11, %c0_12] : memref<2x16xf32, #tpu.memory_space<vmem>>, vector<2x16xf32>
    %23 = arith.mulf %17, %17 : vector<2x16x128xf32>
    %cst_13 = arith.constant dense<0.000000e+00> : vector<2x16xf32>
    %24 = vector.multi_reduction <add>, %23, %cst_13 [2] : vector<2x16x128xf32> to vector<2x16xf32>
    %25 = arith.addf %22, %24 : vector<2x16xf32>
    %c0_14 = arith.constant 0 : index
    %c0_15 = arith.constant 0 : index
    %26 = vector.load %arg7[%c0_14, %c0_15] : memref<2x16xf32, #tpu.memory_space<vmem>>, vector<2x16xf32>
    tpu.vector_store %arg7[%c0_14, %c0_15], %25 {strides = array<i32>} : memref<2x16xf32, #tpu.memory_space<vmem>>, vector<2x16xf32>,
    %c0_16 = arith.constant 0 : index
    %c0_17 = arith.constant 0 : index
    %27 = vector.load %arg8[%c0_16, %c0_17] : memref<2x16xf32, #tpu.memory_space<vmem>>, vector<2x16xf32>
    %cst_18 = arith.constant 0xFF800000 : f32
    %28 = vector.shape_cast %13 : vector<1x1x128xi1> to vector<1x1x128xi1>
    %29 = vector.broadcast %28 : vector<1x1x128xi1> to vector<2x16x128xi1>
    %30 = vector.broadcast %cst_18 : f32 to vector<2x16x128xf32>
    %31 = arith.select %29, %7, %30 : vector<2x16x128xi1>, vector<2x16x128xf32>
    %cst_19 = arith.constant dense<0xFF800000> : vector<2x16xf32>
    %32 = vector.multi_reduction <maximumf>, %31, %cst_19 [2] : vector<2x16x128xf32> to vector<2x16xf32>
    %33 = arith.maximumf %27, %32 : vector<2x16xf32>
    %c0_20 = arith.constant 0 : index
    %c0_21 = arith.constant 0 : index
    %34 = vector.load %arg8[%c0_20, %c0_21] : memref<2x16xf32, #tpu.memory_space<vmem>>, vector<2x16xf32>
    tpu.vector_store %arg8[%c0_20, %c0_21], %33 {strides = array<i32>} : memref<2x16xf32, #tpu.memory_space<vmem>>, vector<2x16xf32>,
    %c0_22 = arith.constant 0 : index
    %c0_23 = arith.constant 0 : index
    %35 = vector.load %arg9[%c0_22, %c0_23] : memref<2x16xf32, #tpu.memory_space<vmem>>, vector<2x16xf32>
    %cst_24 = arith.constant 0x7F800000 : f32
    %36 = vector.shape_cast %13 : vector<1x1x128xi1> to vector<1x1x128xi1>
    %37 = vector.broadcast %36 : vector<1x1x128xi1> to vector<2x16x128xi1>
    %38 = vector.broadcast %cst_24 : f32 to vector<2x16x128xf32>
    %39 = arith.select %37, %7, %38 : vector<2x16x128xi1>, vector<2x16x128xf32>
    %cst_25 = arith.constant dense<0x7F800000> : vector<2x16xf32>
    %40 = vector.multi_reduction <minimumf>, %39, %cst_25 [2] : vector<2x16x128xf32> to vector<2x16xf32>
    %41 = arith.minimumf %35, %40 : vector<2x16xf32>
    %c0_26 = arith.constant 0 : index
    %c0_27 = arith.constant 0 : index
    %42 = vector.load %arg9[%c0_26, %c0_27] : memref<2x16xf32, #tpu.memory_space<vmem>>, vector<2x16xf32>
    tpu.vector_store %arg9[%c0_26, %c0_27], %41 {strides = array<i32>} : memref<2x16xf32, #tpu.memory_space<vmem>>, vector<2x16xf32>,
    %c0_i32_28 = arith.constant 0 : i32
    %43 = arith.cmpi eq, %arg0, %c0_i32_28 : i32
    %44 = arith.extui %43 : i1 to i32
    %c0_i32_29 = arith.constant 0 : i32
    %45 = arith.cmpi ne, %44, %c0_i32_29 : i32
    scf.if %45 {
      %c0_30 = arith.constant 0 : index
      %c0_31 = arith.constant 0 : index
      %46 = vector.load %arg6[%c0_30, %c0_31] : memref<2x16xf32, #tpu.memory_space<vmem>>, vector<2x16xf32>
      %cst_32 = arith.constant dense<0.000000e+00> : vector<16xf32>
      %47 = vector.multi_reduction <add>, %46, %cst_32 [0] : vector<2x16xf32> to vector<16xf32>
      %48 = vector.shape_cast %47 : vector<16xf32> to vector<1x16xf32>
      %cst_33 = arith.constant 1.280000e+02 : f32
      %49 = vector.broadcast %cst_33 : f32 to vector<1x16xf32>
      %50 = arith.divf %48, %49 : vector<1x16xf32>
      %c0_34 = arith.constant 0 : index
      %c0_35 = arith.constant 0 : index
      %51 = vector.load %arg7[%c0_34, %c0_35] : memref<2x16xf32, #tpu.memory_space<vmem>>, vector<2x16xf32>
      %cst_36 = arith.constant dense<0.000000e+00> : vector<16xf32>
      %52 = vector.multi_reduction <add>, %51, %cst_36 [0] : vector<2x16xf32> to vector<16xf32>
      %53 = vector.shape_cast %52 : vector<16xf32> to vector<1x16xf32>
      %cst_37 = arith.constant 1.280000e+02 : f32
      %54 = vector.broadcast %cst_37 : f32 to vector<1x16xf32>
      %55 = arith.divf %53, %54 : vector<1x16xf32>
      %56 = arith.mulf %50, %50 : vector<1x16xf32>
      %57 = arith.subf %55, %56 : vector<1x16xf32>
      %cst_38 = arith.constant 0.000000e+00 : f32
      %58 = vector.broadcast %cst_38 : f32 to vector<1x16xf32>
      %59 = arith.maximumf %57, %58 : vector<1x16xf32>
      %c0_39 = arith.constant 0 : index
      %c0_40 = arith.constant 0 : index
      %60 = vector.load %arg4[%c0_39, %c0_40] : memref<8x16xf32, #tpu.memory_space<vmem>>, vector<8x16xf32>
      %61 = vector.extract_strided_slice %60 {offsets = [0, 0], sizes = [1, 16], strides = [1, 1]} : vector<8x16xf32> to vector<1x16xf32>
      %62 = vector.extract_strided_slice %60 {offsets = [1, 0], sizes = [1, 16], strides = [1, 1]} : vector<8x16xf32> to vector<1x16xf32>
      %63 = vector.extract_strided_slice %60 {offsets = [2, 0], sizes = [1, 16], strides = [1, 1]} : vector<8x16xf32> to vector<1x16xf32>
      %64 = vector.extract_strided_slice %60 {offsets = [3, 0], sizes = [1, 16], strides = [1, 1]} : vector<8x16xf32> to vector<1x16xf32>
      %65 = vector.extract_strided_slice %60 {offsets = [4, 0], sizes = [1, 16], strides = [1, 1]} : vector<8x16xf32> to vector<1x16xf32>
      %cst_41 = arith.constant 9.99999974E-6 : f32
      %66 = vector.broadcast %cst_41 : f32 to vector<1x16xf32>
      %67 = arith.addf %59, %66 : vector<1x16xf32>
      %68 = math.rsqrt %67 : vector<1x16xf32>
      %69 = arith.mulf %61, %68 : vector<1x16xf32>
      %70 = arith.mulf %69, %50 : vector<1x16xf32>
      %71 = arith.subf %62, %70 : vector<1x16xf32>
      %cst_42 = arith.constant 0.000000e+00 : f32
      %72 = vector.broadcast %cst_42 : f32 to vector<1x16xf32>
      %73 = arith.cmpf oge, %69, %72 : vector<1x16xf32>
      %c0_43 = arith.constant 0 : index
      %c0_44 = arith.constant 0 : index
      %74 = vector.load %arg8[%c0_43, %c0_44] : memref<2x16xf32, #tpu.memory_space<vmem>>, vector<2x16xf32>
      %c0_45 = arith.constant 0 : index
      %c0_46 = arith.constant 0 : index
      %75 = vector.load %arg9[%c0_45, %c0_46] : memref<2x16xf32, #tpu.memory_space<vmem>>, vector<2x16xf32>
      %76 = vector.shape_cast %73 : vector<1x16xi1> to vector<1x16xi1>
      %77 = vector.broadcast %76 : vector<1x16xi1> to vector<2x16xi1>
      %78 = arith.select %77, %74, %75 : vector<2x16xi1>, vector<2x16xf32>
      %79 = vector.broadcast %69 : vector<1x16xf32> to vector<2x16xf32>
      %80 = arith.mulf %78, %79 : vector<2x16xf32>
      %81 = vector.broadcast %71 : vector<1x16xf32> to vector<2x16xf32>
      %82 = arith.addf %80, %81 : vector<2x16xf32>
      %cst_47 = arith.constant 0.000000e+00 : f32
      %83 = vector.broadcast %cst_47 : f32 to vector<2x16xf32>
      %84 = arith.maximumf %82, %83 : vector<2x16xf32>
      %c0_48 = arith.constant 0 : index
      %c0_49 = arith.constant 0 : index
      %85 = vector.load %arg3[%c0_48, %c0_49] : memref<48x16xf32, #tpu.memory_space<vmem>>, vector<48x16xf32>
      %86 = vector.extract_strided_slice %85 {offsets = [0, 0], sizes = [16, 16], strides = [1, 1]} : vector<48x16xf32> to vector<16x16xf32>
      %cst_50 = arith.constant dense<0.000000e+00> : vector<2x16xf32>
      %87 = tpu.matmul %84, %86, %cst_50 {dimension_numbers = #tpu.dot_dimension_numbers<[1], [0], [0], [1], [0, 0, 1, 1], [], []>} : vector<2x16xf32>, vector<16x16xf32>, vector<2x16xf32> -> vector<2x16xf32>
      %88 = vector.broadcast %63 : vector<1x16xf32> to vector<2x16xf32>
      %89 = arith.addf %87, %88 : vector<2x16xf32>
      %cst_51 = arith.constant 0.000000e+00 : f32
      %90 = vector.broadcast %cst_51 : f32 to vector<2x16xf32>
      %91 = arith.maximumf %89, %90 : vector<2x16xf32>
      %92 = vector.extract_strided_slice %85 {offsets = [16, 0], sizes = [16, 16], strides = [1, 1]} : vector<48x16xf32> to vector<16x16xf32>
      %cst_52 = arith.constant dense<0.000000e+00> : vector<2x16xf32>
      %93 = tpu.matmul %91, %92, %cst_52 {dimension_numbers = #tpu.dot_dimension_numbers<[1], [0], [0], [1], [0, 0, 1, 1], [], []>} : vector<2x16xf32>, vector<16x16xf32>, vector<2x16xf32> -> vector<2x16xf32>
      %94 = vector.broadcast %64 : vector<1x16xf32> to vector<2x16xf32>
      %95 = arith.addf %93, %94 : vector<2x16xf32>
      %cst_53 = arith.constant 0.000000e+00 : f32
      %96 = vector.broadcast %cst_53 : f32 to vector<2x16xf32>
      %97 = arith.maximumf %95, %96 : vector<2x16xf32>
      %98 = vector.extract_strided_slice %85 {offsets = [32, 0], sizes = [16, 16], strides = [1, 1]} : vector<48x16xf32> to vector<16x16xf32>
      %cst_54 = arith.constant dense<0.000000e+00> : vector<2x16xf32>
      %99 = tpu.matmul %97, %98, %cst_54 {dimension_numbers = #tpu.dot_dimension_numbers<[1], [0], [0], [1], [0, 0, 1, 1], [], []>} : vector<2x16xf32>, vector<16x16xf32>, vector<2x16xf32> -> vector<2x16xf32>
      %100 = vector.broadcast %65 : vector<1x16xf32> to vector<2x16xf32>
      %101 = arith.addf %99, %100 : vector<2x16xf32>
      %102 = vector.extract_strided_slice %101 {offsets = [0, 0], sizes = [2, 4], strides = [1, 1]} : vector<2x16xf32> to vector<2x4xf32>
      %cst_55 = arith.constant dense<0xFF800000> : vector<2xf32>
      %103 = vector.multi_reduction <maximumf>, %102, %cst_55 [1] : vector<2x4xf32> to vector<2xf32>
      %104 = vector.shape_cast %103 : vector<2xf32> to vector<2x1xf32>
      %105 = vector.broadcast %104 : vector<2x1xf32> to vector<2x4xf32>
      %106 = arith.subf %102, %105 : vector<2x4xf32>
      %107 = math.exp %106 : vector<2x4xf32>
      %cst_56 = arith.constant dense<0.000000e+00> : vector<2xf32>
      %108 = vector.multi_reduction <add>, %107, %cst_56 [1] : vector<2x4xf32> to vector<2xf32>
      %109 = vector.shape_cast %108 : vector<2xf32> to vector<2x1xf32>
      %110 = vector.broadcast %109 : vector<2x1xf32> to vector<2x4xf32>
      %111 = arith.divf %107, %110 : vector<2x4xf32>
      %c0_57 = arith.constant 0 : index
      %c0_58 = arith.constant 0 : index
      %112 = vector.load %arg5[%c0_57, %c0_58] : memref<2x4xf32, #tpu.memory_space<vmem>>, vector<2x4xf32>
      tpu.vector_store %arg5[%c0_57, %c0_58], %111 {strides = array<i32>} : memref<2x4xf32, #tpu.memory_space<vmem>>, vector<2x4xf32>,
    } else {
    }
    return
  }
  func.func @transform_0(%arg0: i32) -> (i32, i32, i32) {
    %c0_i32 = arith.constant 0 : i32
    %c0_i32_0 = arith.constant 0 : i32
    %c0_i32_1 = arith.constant 0 : i32
    return %c0_i32, %c0_i32_0, %arg0 : i32, i32, i32
  }
  func.func @transform_1(%arg0: i32) -> (i32, i32) {
    %c0_i32 = arith.constant 0 : i32
    %c0_i32_0 = arith.constant 0 : i32
    %c0_i32_1 = arith.constant 0 : i32
    return %c0_i32, %c0_i32_0 : i32, i32
  }
  func.func @transform_2(%arg0: i32) -> (i32, i32) {
    %c0_i32 = arith.constant 0 : i32
    %c0_i32_0 = arith.constant 0 : i32
    %c0_i32_1 = arith.constant 0 : i32
    return %c0_i32, %c0_i32_0 : i32, i32
  }
  func.func @transform_3(%arg0: i32) -> (i32, i32) {
    %c0_i32 = arith.constant 0 : i32
    %c0_i32_0 = arith.constant 0 : i32
    %c0_i32_1 = arith.constant 0 : i32
    return %c0_i32, %c0_i32_0 : i32, i32
  }
  func.func @transform_4(%arg0: i32) -> (i32, i32) {
    %c0_i32 = arith.constant 0 : i32
    %c0_i32_0 = arith.constant 0 : i32
    %c0_i32_1 = arith.constant 0 : i32
    return %c0_i32, %c0_i32_0 : i32, i32
  }
}

</mosaic_0001>

<llo_original>
// kernel: brain_forward.1
$region0: #{brain_forward.1}
  #allocation0 [shape = 'u32[]', space=smem, size = 0x4, offset = 0x4, fixed_abs, tag = 'smem constant byte address 0x4 - core index']
  #allocation1 [shape = 'u32[144,128]{1,0:T(1,128)}', space=vmem, size = 0x12000, scoped, tag = 'internal scratch']
  #allocation2 [shape = 'f32[2,16]{1,0:T(2,128)}', space=vmem, size = 0x400, scoped, tag = 'scratch operand']
  #allocation3 [shape = 'f32[2,16]{1,0:T(2,128)}', space=vmem, size = 0x400, scoped, tag = 'scratch operand']
  #allocation4 [shape = 'f32[2,16]{1,0:T(2,128)}', space=vmem, size = 0x400, scoped, tag = 'scratch operand']
  #allocation5 [shape = 'f32[2,16]{1,0:T(2,128)}', space=vmem, size = 0x400, scoped, tag = 'scratch operand']
  %s0 = inlined_call_operand.vmem [shape: bf16[2,12,128], index: 0, kind: input, shape index: {}]
  %s1 = inlined_call_operand.vmem [shape: bf16[16,12], index: 1, kind: input, shape index: {}]
  %s2 = inlined_call_operand.vmem [shape: f32[48,16], index: 2, kind: input, shape index: {}]
  %s3 = inlined_call_operand.vmem [shape: f32[8,16], index: 3, kind: input, shape index: {}]
  %s4 = inlined_call_operand.hbm [shape: f32[2,4], index: 4, kind: output, shape index: {}]
  %s5 = sld [smem:[#allocation0]]
  $region34: #{brain_forward.1} parent=0
    _
  %s7 = ssub.s32 1, %s5
  %s8 = scalar_select 0, %s7, %s5
  $region1: #{brain_forward.1} parent=0
    #allocation6 [shape = 'u8[1024]{0}', space=vmem, size = 0x400, scoped, tag = 'output window, operand 0, single buffered']
    #allocation7 [shape = 's32[1]{0}', space=sflag, size = 0x4, scoped, tag = 'scoped memory for brain_forward.1']
    %9 = vsyncpa [#allocation7], 0
    // Predicated region
    $region2: #{brain_forward.1} parent=1 // pred_check
      _
    $region3: #{brain_forward.1} parent=1 // pred_check_branch
      %11 = sbr.rel (0) target = $region5
    $region4: #{brain_forward.1} parent=1 // pred_region
      _
    $region5: #{brain_forward.1} parent=1 // pred_fallthru
      _
    // Predicated region
    $region6: #{brain_forward.1} parent=1 // pred_check
      _
    $region7: #{brain_forward.1} parent=1 // pred_check_branch
      %13 = sbr.rel (0) target = $region9
    $region8: #{brain_forward.1} parent=1 // pred_region
      _
    $region9: #{brain_forward.1} parent=1 // pred_fallthru
      _
    // Predicated region
    $region10: #{brain_forward.1} parent=1 // pred_check
      _
    $region11: #{brain_forward.1} parent=1 // pred_check_branch
      %15 = sbr.rel (0) target = $region13
    $region12: #{brain_forward.1} parent=1 // pred_region
      _
    $region13: #{brain_forward.1} parent=1 // pred_fallthru
      _
    // Predicated region
    $region14: #{brain_forward.1} parent=1 // pred_check
      _
    $region15: #{brain_forward.1} parent=1 // pred_check_branch
      %17 = sbr.rel (0) target = $region17
    $region16: #{brain_forward.1} parent=1 // pred_region
      _
    $region17: #{brain_forward.1} parent=1 // pred_fallthru
      _
    %p19 = scmp.eq.s32.totalorder 0, 0
    // Predicated region
    $region18: #{brain_forward.1} parent=1 // pred_check
      %p20 = pneg %p19
    $region19: #{brain_forward.1} parent=1 // pred_check_branch
      %22 = sbr.rel (%p20) target = $region21
    $region20: #{brain_forward.1} parent=1 // pred_region
      %vm23 = vcmask 123904
      %24 = vst.msk [vmem:[#allocation2] sm:$0x3] %vm23, 0.0
      %25 = vst.msk [vmem:[#allocation3] sm:$0x3] %vm23, 0.0
      %26 = vst.msk [vmem:[#allocation4] sm:$0x3] %vm23, -inf
      %27 = vst.msk [vmem:[#allocation5] sm:$0x3] %vm23, inf
    $region21: #{brain_forward.1} parent=1 // pred_fallthru
      _
    %v28 = vld [vmem:[%s1] sm:$0xf]
    %v29 = vld [vmem:[%s1 + $0x4] sm:$0xf]
    %v30 = vld [vmem:[%s0] sm:$0xf]
    %v31 = vld [vmem:[%s0 + $0x4] sm:$0x3]
    %v32 = vld [vmem:[%s0 + $0x8] sm:$0xf]
    %v33 = vld [vmem:[%s0 + $0xc] sm:$0x3]
    %v36 = vunpack.c.l.b16 %v28
    %v37 = vunpack.c.l.b16 %v29
    %v38 = vpack.c.b16 %v37, %v36
    %v41 = vunpack.c.l.b16 %v30
    %v42 = vunpack.c.l.b16 %v31
    %v43 = vpack.c.b16 %v42, %v41
    %vm44 = vcmask 97280
    %v46 = vsel %vm44, %v38, 0
    %vm48 = vcmask 1045504
    %v50 = vsel %vm48, %v43, 0
    %52 = vmatprep.subr.bf16.mxu0 0
    %53 = vmatpush1.bf16.msra.mxu0 %v50
    %54 = vmatprep.subr.bf16.mxu0 0
    %55 = vmatpush1.bf16.msra.mxu0 0
    %56 = vmatprep.subr.bf16.mxu0 0
    %57 = vmatpush1.bf16.msra.mxu0 0
    %58 = vmatprep.subr.bf16.mxu0 0
    %59 = vmatpush1.bf16.msra.mxu0 0
    %60 = vmatprep.subr.bf16.mxu0 0
    %61 = vmatpush1.bf16.msra.mxu0 0
    %62 = vmatprep.subr.bf16.mxu0 0
    %63 = vmatpush1.bf16.msra.mxu0 0
    %64 = vmatprep.subr.bf16.mxu0 0
    %65 = vmatpush1.bf16.msra.mxu0 0
    %66 = vmatprep.subr.bf16.mxu0 0
    %67 = vmatpush1.bf16.msra.mxu0 0
    %68 = vmatprep.subr.bf16.mxu0 0
    %69 = vmatpush1.bf16.msra.mxu0 0
    %70 = vmatprep.subr.bf16.mxu0 0
    %71 = vmatpush1.bf16.msra.mxu0 0
    %72 = vmatprep.subr.bf16.mxu0 0
    %73 = vmatpush1.bf16.msra.mxu0 0
    %74 = vmatprep.subr.bf16.mxu0 0
    %75 = vmatpush1.bf16.msra.mxu0 0
    %76 = vmatprep.subr.bf16.mxu0 0
    %77 = vmatpush1.bf16.msra.mxu0 0
    %78 = vmatprep.subr.bf16.mxu0 0
    %79 = vmatpush1.bf16.msra.mxu0 0
    %80 = vmatprep.subr.bf16.mxu0 0
    %81 = vmatpush1.bf16.msra.mxu0 0
    %82 = vmatprep.subr.bf16.mxu0 0
    %83 = vmatpush1.bf16.msra.mxu0 0
    %84 = vmatprep.mubr.bf16.mxu0 0
    %85 = vmatmul.mubr.bf16.gmra.mrb[0].mxu0 %v46
    %v86 = vpop.f32.mrb[0].mxu0
    %v87 = vadd.f32 0.0, %v86
    %v88 = vpop.f32.mrb[0].mxu0
    %v89 = vpop.f32.mrb[0].mxu0
    %v90 = vadd.f32 0.0, %v89
    %v91 = vpop.f32.mrb[0].mxu0
    %92 = vdwg.mxu0
    %v95 = vunpack.c.l.b16 %v32
    %v96 = vunpack.c.l.b16 %v33
    %v97 = vpack.c.b16 %v96, %v95
    %v99 = vsel %vm48, %v97, 0
    %101 = vmatprep.subr.bf16.mxu0 0
    %102 = vmatpush1.bf16.msra.mxu0 %v99
    %103 = vmatprep.subr.bf16.mxu0 0
    %104 = vmatpush1.bf16.msra.mxu0 0
    %105 = vmatprep.subr.bf16.mxu0 0
    %106 = vmatpush1.bf16.msra.mxu0 0
    %107 = vmatprep.subr.bf16.mxu0 0
    %108 = vmatpush1.bf16.msra.mxu0 0
    %109 = vmatprep.subr.bf16.mxu0 0
    %110 = vmatpush1.bf16.msra.mxu0 0
    %111 = vmatprep.subr.bf16.mxu0 0
    %112 = vmatpush1.bf16.msra.mxu0 0
    %113 = vmatprep.subr.bf16.mxu0 0
    %114 = vmatpush1.bf16.msra.mxu0 0
    %115 = vmatprep.subr.bf16.mxu0 0
    %116 = vmatpush1.bf16.msra.mxu0 0
    %117 = vmatprep.subr.bf16.mxu0 0
    %118 = vmatpush1.bf16.msra.mxu0 0
    %119 = vmatprep.subr.bf16.mxu0 0
    %120 = vmatpush1.bf16.msra.mxu0 0
    %121 = vmatprep.subr.bf16.mxu0 0
    %122 = vmatpush1.bf16.msra.mxu0 0
    %123 = vmatprep.subr.bf16.mxu0 0
    %124 = vmatpush1.bf16.msra.mxu0 0
    %125 = vmatprep.subr.bf16.mxu0 0
    %126 = vmatpush1.bf16.msra.mxu0 0
    %127 = vmatprep.subr.bf16.mxu0 0
    %128 = vmatpush1.bf16.msra.mxu0 0
    %129 = vmatprep.subr.bf16.mxu0 0
    %130 = vmatpush1.bf16.msra.mxu0 0
    %131 = vmatprep.subr.bf16.mxu0 0
    %132 = vmatpush1.bf16.msra.mxu0 0
    %133 = vmatprep.mubr.bf16.mxu0 0
    %134 = vmatmul.mubr.bf16.gmra.mrb[0].mxu0 %v46
    %v135 = vpop.f32.mrb[0].mxu0
    %v136 = vadd.f32 0.0, %v135
    %v137 = vpop.f32.mrb[0].mxu0
    %v138 = vpop.f32.mrb[0].mxu0
    %v139 = vadd.f32 0.0, %v138
    %v140 = vpop.f32.mrb[0].mxu0
    %141 = vdwg.mxu0
    %v142 = vlaneseq
    %v143 = vand.u32 %v142, 127
    %s144 = smul.u32 0, 128
    %v145 = vstv %s144
    %v146 = vadd.s32 %v143, %v145
    %vm147 = vcmp.lt.s32.totalorder %v146, 64
    %v148 = vsel %vm147, 1, 0
    %vm149 = vcmp.eq.s32.totalorder %v148, 1
    %v150 = vsel %vm149, %v87, 0.0
    %v151 = vsel %vm149, %v90, 0.0
    %v152 = vsel %vm149, %v136, 0.0
    %v153 = vsel %vm149, %v139, 0.0
    %v154 = vld [vmem:[#allocation2] sm:$0x3]
    %155 = vadd.xlane.f32.xlu0 %v150
    %v156 = vpop.xlane.xlu0 %155
    %157 = vadd.xlane.f32.xlu0 %v151
    %v158 = vpop.xlane.xlu0 %157
    %159 = vadd.xlane.f32.xlu0 %v152
    %v160 = vpop.xlane.xlu0 %159
    %161 = vadd.xlane.f32.xlu0 %v153
    %v162 = vpop.xlane.xlu0 %161
    %v167 = vlaneseq
    %v168 = vshrl.u32 %v167, 7
    %v169 = vsub.s32 %v143, %v168
    %v170 = vrot.slane %v156, %v169
    %v171 = vadd.s32 %v143, 4294967288
    %v172 = vlaneseq
    %v173 = vshrl.u32 %v172, 7
    %v174 = vsub.s32 %v171, %v173
    %v175 = vrot.slane %v158, %v174
    %vm176 = vcmask 130112
    %v177 = vsel %vm176, %v175, %v170
    %v178 = vlaneseq
    %v179 = vshrl.u32 %v178, 7
    %v180 = vsub.s32 %v143, %v179
    %v181 = vrot.slane %v160, %v180
    %v182 = vlaneseq
    %v183 = vshrl.u32 %v182, 7
    %v184 = vsub.s32 %v171, %v183
    %v185 = vrot.slane %v162, %v184
    %v186 = vsel %vm176, %v185, %v181
    %vm187 = vcmask 1041409
    %v188 = vsel %vm187, %v186, %v177
    %v190 = vadd.f32 %v154, %v188
    %vm191 = vcmask 123904
    %192 = vst.msk [vmem:[#allocation2] sm:$0x3] %vm191, %v190
    %v193 = vld [vmem:[#allocation3] sm:$0x3]
    %v194 = vmul.f32 %v150, %v150
    %v195 = vmul.f32 %v151, %v151
    %v196 = vmul.f32 %v152, %v152
    %v197 = vmul.f32 %v153, %v153
    %198 = vadd.xlane.f32.xlu0 %v194
    %v199 = vpop.xlane.xlu0 %198
    %200 = vadd.xlane.f32.xlu0 %v195
    %v201 = vpop.xlane.xlu0 %200
    %202 = vadd.xlane.f32.xlu0 %v196
    %v203 = vpop.xlane.xlu0 %202
    %204 = vadd.xlane.f32.xlu0 %v197
    %v205 = vpop.xlane.xlu0 %204
    %v210 = vlaneseq
    %v211 = vshrl.u32 %v210, 7
    %v212 = vsub.s32 %v143, %v211
    %v213 = vrot.slane %v199, %v212
    %v214 = vlaneseq
    %v215 = vshrl.u32 %v214, 7
    %v216 = vsub.s32 %v171, %v215
    %v217 = vrot.slane %v201, %v216
    %v218 = vsel %vm176, %v217, %v213
    %v219 = vlaneseq
    %v220 = vshrl.u32 %v219, 7
    %v221 = vsub.s32 %v143, %v220
    %v222 = vrot.slane %v203, %v221
    %v223 = vlaneseq
    %v224 = vshrl.u32 %v223, 7
    %v225 = vsub.s32 %v171, %v224
    %v226 = vrot.slane %v205, %v225
    %v227 = vsel %vm176, %v226, %v222
    %v228 = vsel %vm187, %v227, %v218
    %v230 = vadd.f32 %v193, %v228
    %231 = vst.msk [vmem:[#allocation3] sm:$0x3] %vm191, %v230
    %v232 = vld [vmem:[#allocation4] sm:$0x3]
    %v233 = vsel %vm149, %v87, -inf
    %v234 = vsel %vm149, %v90, -inf
    %v235 = vsel %vm149, %v136, -inf
    %v236 = vsel %vm149, %v139, -inf
    %237 = vmax.xlane.f32.xlu0 %v233
    %v238 = vpop.xlane.xlu0 %237
    %239 = vmax.xlane.f32.xlu0 %v234
    %v240 = vpop.xlane.xlu0 %239
    %241 = vmax.xlane.f32.xlu0 %v235
    %v242 = vpop.xlane.xlu0 %241
    %243 = vmax.xlane.f32.xlu0 %v236
    %v244 = vpop.xlane.xlu0 %243
    %v249 = vlaneseq
    %v250 = vshrl.u32 %v249, 7
    %v251 = vsub.s32 %v143, %v250
    %v252 = vrot.slane %v238, %v251
    %v253 = vlaneseq
    %v254 = vshrl.u32 %v253, 7
    %v255 = vsub.s32 %v171, %v254
    %v256 = vrot.slane %v240, %v255
    %v257 = vsel %vm176, %v256, %v252
    %v258 = vlaneseq
    %v259 = vshrl.u32 %v258, 7
    %v260 = vsub.s32 %v143, %v259
    %v261 = vrot.slane %v242, %v260
    %v262 = vlaneseq
    %v263 = vshrl.u32 %v262, 7
    %v264 = vsub.s32 %v171, %v263
    %v265 = vrot.slane %v244, %v264
    %v266 = vsel %vm176, %v265, %v261
    %v267 = vsel %vm187, %v266, %v257
    %v269 = vmax.f32 %v232, %v267
    %270 = vst.msk [vmem:[#allocation4] sm:$0x3] %vm191, %v269
    %v271 = vld [vmem:[#allocation5] sm:$0x3]
    %v272 = vsel %vm149, %v87, inf
    %v273 = vsel %vm149, %v90, inf
    %v274 = vsel %vm149, %v136, inf
    %v275 = vsel %vm149, %v139, inf
    %276 = vmin.xlane.f32.xlu0 %v272
    %v277 = vpop.xlane.xlu0 %276
    %278 = vmin.xlane.f32.xlu0 %v273
    %v279 = vpop.xlane.xlu0 %278
    %280 = vmin.xlane.f32.xlu0 %v274
    %v281 = vpop.xlane.xlu0 %280
    %282 = vmin.xlane.f32.xlu0 %v275
    %v283 = vpop.xlane.xlu0 %282
    %v288 = vlaneseq
    %v289 = vshrl.u32 %v288, 7
    %v290 = vsub.s32 %v143, %v289
    %v291 = vrot.slane %v277, %v290
    %v292 = vlaneseq
    %v293 = vshrl.u32 %v292, 7
    %v294 = vsub.s32 %v171, %v293
    %v295 = vrot.slane %v279, %v294
    %v296 = vsel %vm176, %v295, %v291
    %v297 = vlaneseq
    %v298 = vshrl.u32 %v297, 7
    %v299 = vsub.s32 %v143, %v298
    %v300 = vrot.slane %v281, %v299
    %v301 = vlaneseq
    %v302 = vshrl.u32 %v301, 7
    %v303 = vsub.s32 %v171, %v302
    %v304 = vrot.slane %v283, %v303
    %v305 = vsel %vm176, %v304, %v300
    %v306 = vsel %vm187, %v305, %v296
    %v308 = vmin.f32 %v271, %v306
    %309 = vst.msk [vmem:[#allocation5] sm:$0x3] %vm191, %v308
    // Predicated region
    $region22: #{brain_forward.1} parent=1 // pred_check
      %p310 = pneg %p19
    $region23: #{brain_forward.1} parent=1 // pred_check_branch
      %312 = sbr.rel (%p310) target = $region25
    $region24: #{brain_forward.1} parent=1 // pred_region
      %v313 = vld [vmem:[#allocation2] sm:$0x3]
      %v314 = vsel %vm191, %v313, 0.0
      %v315 = vrot.slane %v314, 4
      %v316 = vadd.f32 %v314, %v315
      %v317 = vrot.slane %v316, 2
      %v318 = vadd.f32 %v316, %v317
      %v319 = vrot.slane %v318, 1
      %v320 = vadd.f32 %v318, %v319
      %v321 = vrcp.pop 128.0
      %v322 = vmul.f32 %v320, %v321
      %v323 = vld [vmem:[#allocation3] sm:$0x3]
      %v324 = vsel %vm191, %v323, 0.0
      %v325 = vrot.slane %v324, 4
      %v326 = vadd.f32 %v324, %v325
      %v327 = vrot.slane %v326, 2
      %v328 = vadd.f32 %v326, %v327
      %v329 = vrot.slane %v328, 1
      %v330 = vadd.f32 %v328, %v329
      %v331 = vmul.f32 %v330, %v321
      %v332 = vmul.f32 %v322, %v322
      %v333 = vsub.f32 %v331, %v332
      %v334 = vmax.f32 %v333, 0.0
      %v335 = vld [vmem:[%s3] sm:$0xff]
      %v336 = vadd.f32 %v334, 1e-05
      %v337 = vrsqrt.pop %v336
      %v338 = vmul.f32 %v335, %v337
      %v339 = vmul.f32 %v338, %v322
      %v341 = vrot.slane %v339, 7
      %v343 = vsub.f32 %v335, %v341
      %vm344 = vcmp.ge.f32.partialorder %v338, 0.0
      %v345 = vld [vmem:[#allocation4] sm:$0x3]
      %v346 = vld [vmem:[#allocation5] sm:$0x3]
      %v347 = vsel %vm344, 1, 0
      %v348 = vlaneseq
      %v349 = vshrl.u32 %v348, 7
      %v350 = vsub.s32 0, %v349
      %v351 = vrot.slane %v347, %v350
      %vm352 = vcmp.eq.s32.totalorder %v351, 1
      %v353 = vsel %vm352, %v345, %v346
      %v354 = vlaneseq
      %v355 = vshrl.u32 %v354, 7
      %v356 = vsub.s32 0, %v355
      %v357 = vrot.slane %v338, %v356
      %v358 = vmul.f32 %v353, %v357
      %v359 = vlaneseq
      %v360 = vshrl.u32 %v359, 7
      %v361 = vsub.s32 1, %v360
      %v362 = vrot.slane %v343, %v361
      %v363 = vadd.f32 %v358, %v362
      %v364 = vmax.f32 %v363, 0.0
      %v365 = vld [vmem:[%s2] sm:$0xff]
      %v366 = vld [vmem:[%s2 + $0x8] sm:$0xff]
      %v367 = vld [vmem:[%s2 + $0x10] sm:$0xff]
      %v368 = vld [vmem:[%s2 + $0x18] sm:$0xff]
      %v369 = vld [vmem:[%s2 + $0x20] sm:$0xff]
      %v370 = vld [vmem:[%s2 + $0x28] sm:$0xff]
      %v371 = vlaneseq
      %v372 = vshrl.u32 %v371, 7
      %v373 = vsub.s32 2, %v372
      %v374 = vrot.slane %v335, %v373
      %vm375 = vcmask 130048
      %v377 = vsel %vm375, %v364, 0
      %379 = vmatprep.subr.mxu0 0.0
      %380 = vmatpush1.msra.mxu0 %v365
      %381 = vmatprep.subr.mxu0 0.0
      %382 = vmatpush1.msra.mxu0 %v366
      %383 = vmatprep.subr.mxu0 0.0
      %384 = vmatpush1.msra.mxu0 0.0
      %385 = vmatprep.subr.mxu0 0.0
      %386 = vmatpush1.msra.mxu0 0.0
      %387 = vmatprep.subr.mxu0 0.0
      %388 = vmatpush1.msra.mxu0 0.0
      %389 = vmatprep.subr.mxu0 0.0
      %390 = vmatpush1.msra.mxu0 0.0
      %391 = vmatprep.subr.mxu0 0.0
      %392 = vmatpush1.msra.mxu0 0.0
      %393 = vmatprep.subr.mxu0 0.0
      %394 = vmatpush1.msra.mxu0 0.0
      %395 = vmatprep.subr.mxu0 0.0
      %396 = vmatpush1.msra.mxu0 0.0
      %397 = vmatprep.subr.mxu0 0.0
      %398 = vmatpush1.msra.mxu0 0.0
      %399 = vmatprep.subr.mxu0 0.0
      %400 = vmatpush1.msra.mxu0 0.0
      %401 = vmatprep.subr.mxu0 0.0
      %402 = vmatpush1.msra.mxu0 0.0
      %403 = vmatprep.subr.mxu0 0.0
      %404 = vmatpush1.msra.mxu0 0.0
      %405 = vmatprep.subr.mxu0 0.0
      %406 = vmatpush1.msra.mxu0 0.0
      %407 = vmatprep.subr.mxu0 0.0
      %408 = vmatpush1.msra.mxu0 0.0
      %409 = vmatprep.subr.mxu0 0.0
      %410 = vmatpush1.msra.mxu0 0.0
      %411 = vmatprep.subr.mxu0 0.0
      %412 = vmatpush1.msra.mxu0 0.0
      %413 = vmatprep.subr.mxu0 0.0
      %414 = vmatpush1.msra.mxu0 0.0
      %415 = vmatprep.subr.mxu0 0.0
      %416 = vmatpush1.msra.mxu0 0.0
      %417 = vmatprep.subr.mxu0 0.0
      %418 = vmatpush1.msra.mxu0 0.0
      %419 = vmatprep.subr.mxu0 0.0
      %420 = vmatpush1.msra.mxu0 0.0
      %421 = vmatprep.subr.mxu0 0.0
      %422 = vmatpush1.msra.mxu0 0.0
      %423 = vmatprep.subr.mxu0 0.0
      %424 = vmatpush1.msra.mxu0 0.0
      %425 = vmatprep.subr.mxu0 0.0
      %426 = vmatpush1.msra.mxu0 0.0
      %427 = vmatprep.subr.mxu0 0.0
      %428 = vmatpush1.msra.mxu0 0.0
      %429 = vmatprep.subr.mxu0 0.0
      %430 = vmatpush1.msra.mxu0 0.0
      %431 = vmatprep.subr.mxu0 0.0
      %432 = vmatpush1.msra.mxu0 0.0
      %433 = vmatprep.subr.mxu0 0.0
      %434 = vmatpush1.msra.mxu0 0.0
      %435 = vmatprep.subr.mxu0 0.0
      %436 = vmatpush1.msra.mxu0 0.0
      %437 = vmatprep.subr.mxu0 0.0
      %438 = vmatpush1.msra.mxu0 0.0
      %439 = vmatprep.subr.mxu0 0.0
      %440 = vmatpush1.msra.mxu0 0.0
      %441 = vmatprep.subr.mxu0 0.0
      %442 = vmatpush1.msra.mxu0 0.0
      %443 = vmatprep.mubr.f32.mxu0 0.0
      %444 = vmatmul.mubr.f32.gmra.mrb[0].mxu0 %v377
      %v445 = vpop.f32.mrb[0].mxu0
      %v446 = vadd.f32 %v374, %v445
      %v447 = vpop.f32.mrb[0].mxu0
      %448 = vdwg.mxu0
      %v449 = vmax.f32 %v446, 0.0
      %v450 = vlaneseq
      %v451 = vshrl.u32 %v450, 7
      %v452 = vsub.s32 3, %v451
      %v453 = vrot.slane %v335, %v452
      %v455 = vsel %vm375, %v449, 0
      %457 = vmatprep.subr.mxu0 0.0
      %458 = vmatpush1.msra.mxu0 %v367
      %459 = vmatprep.subr.mxu0 0.0
      %460 = vmatpush1.msra.mxu0 %v368
      %461 = vmatprep.subr.mxu0 0.0
      %462 = vmatpush1.msra.mxu0 0.0
      %463 = vmatprep.subr.mxu0 0.0
      %464 = vmatpush1.msra.mxu0 0.0
      %465 = vmatprep.subr.mxu0 0.0
      %466 = vmatpush1.msra.mxu0 0.0
      %467 = vmatprep.subr.mxu0 0.0
      %468 = vmatpush1.msra.mxu0 0.0
      %469 = vmatprep.subr.mxu0 0.0
      %470 = vmatpush1.msra.mxu0 0.0
      %471 = vmatprep.subr.mxu0 0.0
      %472 = vmatpush1.msra.mxu0 0.0
      %473 = vmatprep.subr.mxu0 0.0
      %474 = vmatpush1.msra.mxu0 0.0
      %475 = vmatprep.subr.mxu0 0.0
      %476 = vmatpush1.msra.mxu0 0.0
      %477 = vmatprep.subr.mxu0 0.0
      %478 = vmatpush1.msra.mxu0 0.0
      %479 = vmatprep.subr.mxu0 0.0
      %480 = vmatpush1.msra.mxu0 0.0
      %481 = vmatprep.subr.mxu0 0.0
      %482 = vmatpush1.msra.mxu0 0.0
      %483 = vmatprep.subr.mxu0 0.0
      %484 = vmatpush1.msra.mxu0 0.0
      %485 = vmatprep.subr.mxu0 0.0
      %486 = vmatpush1.msra.mxu0 0.0
      %487 = vmatprep.subr.mxu0 0.0
      %488 = vmatpush1.msra.mxu0 0.0
      %489 = vmatprep.subr.mxu0 0.0
      %490 = vmatpush1.msra.mxu0 0.0
      %491 = vmatprep.subr.mxu0 0.0
      %492 = vmatpush1.msra.mxu0 0.0
      %493 = vmatprep.subr.mxu0 0.0
      %494 = vmatpush1.msra.mxu0 0.0
      %495 = vmatprep.subr.mxu0 0.0
      %496 = vmatpush1.msra.mxu0 0.0
      %497 = vmatprep.subr.mxu0 0.0
      %498 = vmatpush1.msra.mxu0 0.0
      %499 = vmatprep.subr.mxu0 0.0
      %500 = vmatpush1.msra.mxu0 0.0
      %501 = vmatprep.subr.mxu0 0.0
      %502 = vmatpush1.msra.mxu0 0.0
      %503 = vmatprep.subr.mxu0 0.0
      %504 = vmatpush1.msra.mxu0 0.0
      %505 = vmatprep.subr.mxu0 0.0
      %506 = vmatpush1.msra.mxu0 0.0
      %507 = vmatprep.subr.mxu0 0.0
      %508 = vmatpush1.msra.mxu0 0.0
      %509 = vmatprep.subr.mxu0 0.0
      %510 = vmatpush1.msra.mxu0 0.0
      %511 = vmatprep.subr.mxu0 0.0
      %512 = vmatpush1.msra.mxu0 0.0
      %513 = vmatprep.subr.mxu0 0.0
      %514 = vmatpush1.msra.mxu0 0.0
      %515 = vmatprep.subr.mxu0 0.0
      %516 = vmatpush1.msra.mxu0 0.0
      %517 = vmatprep.subr.mxu0 0.0
      %518 = vmatpush1.msra.mxu0 0.0
      %519 = vmatprep.subr.mxu0 0.0
      %520 = vmatpush1.msra.mxu0 0.0
      %521 = vmatprep.mubr.f32.mxu0 0.0
      %522 = vmatmul.mubr.f32.gmra.mrb[0].mxu0 %v455
      %v523 = vpop.f32.mrb[0].mxu0
      %v524 = vadd.f32 %v453, %v523
      %v525 = vpop.f32.mrb[0].mxu0
      %526 = vdwg.mxu0
      %v527 = vmax.f32 %v524, 0.0
      %v528 = vlaneseq
      %v529 = vshrl.u32 %v528, 7
      %v530 = vsub.s32 4, %v529
      %v531 = vrot.slane %v335, %v530
      %v533 = vsel %vm375, %v527, 0
      %535 = vmatprep.subr.mxu0 0.0
      %536 = vmatpush1.msra.mxu0 %v369
      %537 = vmatprep.subr.mxu0 0.0
      %538 = vmatpush1.msra.mxu0 %v370
      %539 = vmatprep.subr.mxu0 0.0
      %540 = vmatpush1.msra.mxu0 0.0
      %541 = vmatprep.subr.mxu0 0.0
      %542 = vmatpush1.msra.mxu0 0.0
      %543 = vmatprep.subr.mxu0 0.0
      %544 = vmatpush1.msra.mxu0 0.0
      %545 = vmatprep.subr.mxu0 0.0
      %546 = vmatpush1.msra.mxu0 0.0
      %547 = vmatprep.subr.mxu0 0.0
      %548 = vmatpush1.msra.mxu0 0.0
      %549 = vmatprep.subr.mxu0 0.0
      %550 = vmatpush1.msra.mxu0 0.0
      %551 = vmatprep.subr.mxu0 0.0
      %552 = vmatpush1.msra.mxu0 0.0
      %553 = vmatprep.subr.mxu0 0.0
      %554 = vmatpush1.msra.mxu0 0.0
      %555 = vmatprep.subr.mxu0 0.0
      %556 = vmatpush1.msra.mxu0 0.0
      %557 = vmatprep.subr.mxu0 0.0
      %558 = vmatpush1.msra.mxu0 0.0
      %559 = vmatprep.subr.mxu0 0.0
      %560 = vmatpush1.msra.mxu0 0.0
      %561 = vmatprep.subr.mxu0 0.0
      %562 = vmatpush1.msra.mxu0 0.0
      %563 = vmatprep.subr.mxu0 0.0
      %564 = vmatpush1.msra.mxu0 0.0
      %565 = vmatprep.subr.mxu0 0.0
      %566 = vmatpush1.msra.mxu0 0.0
      %567 = vmatprep.subr.mxu0 0.0
      %568 = vmatpush1.msra.mxu0 0.0
      %569 = vmatprep.subr.mxu0 0.0
      %570 = vmatpush1.msra.mxu0 0.0
      %571 = vmatprep.subr.mxu0 0.0
      %572 = vmatpush1.msra.mxu0 0.0
      %573 = vmatprep.subr.mxu0 0.0
      %574 = vmatpush1.msra.mxu0 0.0
      %575 = vmatprep.subr.mxu0 0.0
      %576 = vmatpush1.msra.mxu0 0.0
      %577 = vmatprep.subr.mxu0 0.0
      %578 = vmatpush1.msra.mxu0 0.0
      %579 = vmatprep.subr.mxu0 0.0
      %580 = vmatpush1.msra.mxu0 0.0
      %581 = vmatprep.subr.mxu0 0.0
      %582 = vmatpush1.msra.mxu0 0.0
      %583 = vmatprep.subr.mxu0 0.0
      %584 = vmatpush1.msra.mxu0 0.0
      %585 = vmatprep.subr.mxu0 0.0
      %586 = vmatpush1.msra.mxu0 0.0
      %587 = vmatprep.subr.mxu0 0.0
      %588 = vmatpush1.msra.mxu0 0.0
      %589 = vmatprep.subr.mxu0 0.0
      %590 = vmatpush1.msra.mxu0 0.0
      %591 = vmatprep.subr.mxu0 0.0
      %592 = vmatpush1.msra.mxu0 0.0
      %593 = vmatprep.subr.mxu0 0.0
      %594 = vmatpush1.msra.mxu0 0.0
      %595 = vmatprep.subr.mxu0 0.0
      %596 = vmatpush1.msra.mxu0 0.0
      %597 = vmatprep.subr.mxu0 0.0
      %598 = vmatpush1.msra.mxu0 0.0
      %599 = vmatprep.mubr.f32.mxu0 0.0
      %600 = vmatmul.mubr.f32.gmra.mrb[0].mxu0 %v533
      %v601 = vpop.f32.mrb[0].mxu0
      %v602 = vadd.f32 %v531, %v601
      %v603 = vpop.f32.mrb[0].mxu0
      %604 = vdwg.mxu0
      %vm605 = vcmask 25600
      %v606 = vsel %vm605, %v602, -inf
      %607 = vmax.xlane.f32.xlu0 %v606
      %v608 = vpop.xlane.xlu0 %607
      %v609 = vsub.f32 %v602, %v608
      %v610 = vmul.f32 %v609, 1.442695
      %v611 = vpow.pop %v610
      %v612 = vsel %vm605, %v611, 0.0
      %613 = vadd.xlane.f32.xlu0 %v612
      %v614 = vpop.xlane.xlu0 %613
      %v615 = vrcp.pop %v614
      %v616 = vmul.f32 %v611, %v615
      %617 = vst.msk [vmem:[#allocation6] sm:$0x3] %vm605, %v616
    $region25: #{brain_forward.1} parent=1 // pred_fallthru
      _
    // Predicated region
    $region26: #{brain_forward.1} parent=1 // pred_check
      _
    $region27: #{brain_forward.1} parent=1 // pred_check_branch
      %619 = sbr.rel (0) target = $region29
    $region28: #{brain_forward.1} parent=1 // pred_region
      %s621 = ssub.s32 32, 32
      %622 = vsyncadd [#allocation7], %s621
      %s624 = sshll.u32 [#allocation6], 4
      %s625 = int_to_ptr.vmem [resolvable:$true] %s624
      %627 = dma.vmem_to_hbm [thread:$0]  %s625, 32, %s4, [#allocation7]
    $region29: #{brain_forward.1} parent=1 // pred_fallthru
      _
    // Predicated region
    $region30: #{brain_forward.1} parent=1 // pred_check
      _
    $region31: #{brain_forward.1} parent=1 // pred_check_branch
      %629 = sbr.rel (0) target = $region33
    $region32: #{brain_forward.1} parent=1 // pred_region
      %630 = dma.done [#allocation7], 32
    $region33: #{brain_forward.1} parent=1 // pred_fallthru
      _
    %631 = vsyncpa [#allocation7], 1

</llo_original>
